<compile_context>
chip_gen: v5e
topology: v5e:2x2
jax: 0.10.0
libtpu: 0.0.40
codegen_flags: <defaults>
</compile_context>

<pallas_src>
import jax
import jax.numpy as jnp
import numpy as np
from jax.experimental import pallas as pl
from jax.experimental.pallas import tpu as pltpu


def _round_up(x, m):
    return (x + m - 1) // m * m


def ntn_kernel(e1_ref, e2_ref, t1_ref, rep_ref, sel_ref, w1a_ref, w1b_ref,
               scale_ref, shift_ref, out_ref):
    """Fused NTN forward for one batch tile.

    e1_ref, e2_ref : (bb, E)    f32   activations (cast to bf16 in-kernel)
    t1_ref         : (E, T*E)   bf16  T1.view(E, E*T)
    rep_ref        : (E, T*E)   bf16  0/1, rep[n, q] = (q %  E == n)  (tiles e2 on-chip)
    sel_ref        : (T*E, T)   bf16  0/1, sel[q, m] = (q // E == m)  (per-m reduction)
    w1a_ref/w1b_ref: (E, T)     bf16  halves of W1^T (bias folded into shift)
    scale_ref      : (T, 1)     f32   gamma / sqrt(var + eps)
    shift_ref      : (T, 1)     f32   (W1_b - mean) * scale + beta
    out_ref        : (T, bb)    f32   transposed, lane-dense output block
    """
    e1b = e1_ref[...].astype(jnp.bfloat16)                                   # (bb, E)
    e2b = e2_ref[...].astype(jnp.bfloat16)                                   # (bb, E)

    # M[b, m*E + n] = sum_e e1[b, e] * T1[e, m*E + n]                         (MXU)
    m_big = jnp.dot(e1b, t1_ref[...], preferred_element_type=jnp.float32)    # (bb, T*E)
    # e2 replicated T times along lanes, built in VMEM via a 0/1 matmul
    # (no replicated tensor ever touches HBM).
    e2rep = jnp.dot(e2b, rep_ref[...], preferred_element_type=jnp.float32)   # (bb, T*E)
    prod = (m_big * e2rep).astype(jnp.bfloat16)                              # (bb, T*E)

    # tp[b, m]  = sum_n prod[b, m*E + n]        (0/1 selector matmul, MXU)
    # lin[b, m] = e1 @ W1a^T + e2 @ W1b^T       (bias folded into shift)
    r = (jnp.dot(prod, sel_ref[...], preferred_element_type=jnp.float32) +
         jnp.dot(e1b, w1a_ref[...], preferred_element_type=jnp.float32) +
         jnp.dot(e2b, w1b_ref[...], preferred_element_type=jnp.float32))     # (bb, T)

    # Transpose the small result on the (idle) XLU so the BatchNorm/tanh
    # epilogue and the store are lane-dense: (bb, T) -> (T, bb).
    r_t = jnp.transpose(r)                                                   # (T, bb)
    out_ref[...] = jnp.tanh(r_t * scale_ref[...] + shift_ref[...])


def make_ntn_forward(params, *, block_b=2048, transposed_output=False):
    """Precompute all constants once and return a jitted forward(emb1, emb2)."""
    T = int(params["tensor_dim"])
    E = int(params["W1_w"].shape[1]) // 2
    eps = 1e-5
    block_b = max(128, _round_up(int(block_b), 128))    # lane-aligned batch tile

    # ---- hoisted constant preparation (runs once, not per call) -------------
    t1_mat = jnp.asarray(params["T1"]).reshape(E, E * T).astype(jnp.bfloat16)   # (E, T*E)
    rep = (jnp.arange(T * E)[None, :] % E ==
           jnp.arange(E)[:, None]).astype(jnp.bfloat16)                         # (E, T*E)
    sel = (jnp.arange(T * E)[:, None] // E ==
           jnp.arange(T)[None, :]).astype(jnp.bfloat16)                         # (T*E, T)
    w1a = jnp.asarray(params["W1_w"])[:, :E].T.astype(jnp.bfloat16)             # (E, T)
    w1b = jnp.asarray(params["W1_w"])[:, E:].T.astype(jnp.bfloat16)             # (E, T)
    s = (params["bn_gamma"] / jnp.sqrt(params["bn_var"] + eps)).astype(jnp.float32)
    scale = s.reshape(T, 1)                                                     # (T, 1)
    shift = ((params["W1_b"] - params["bn_mean"]) * s +
             params["bn_beta"]).reshape(T, 1).astype(jnp.float32)               # (T, 1)

    @jax.jit
    def forward(emb1, emb2):
        B = emb1.shape[0]
        # f32 inputs go straight into the kernel: no host-side cast / pad pass.
        e1 = emb1.reshape(B, E)
        e2 = emb2.reshape(B, E)

        # Single exact block for small B (block dims == array dims); otherwise a
        # lane-aligned tile with a masked ragged tail and >= 2 grid steps so the
        # batch axis can be split across TensorCores (v7x megacore).
        bb = B if B <= block_b else block_b
        grid = (pl.cdiv(B, bb),)

        out_t = pl.pallas_call(
            ntn_kernel,
            out_shape=jax.ShapeDtypeStruct((T, B), jnp.float32),
            grid=grid,
            in_specs=[
                pl.BlockSpec((bb, E), lambda i: (i, 0)),         # e1 tile
                pl.BlockSpec((bb, E), lambda i: (i, 0)),         # e2 tile
                pl.BlockSpec((E, T * E), lambda i: (0, 0)),      # T1        (resident)
                pl.BlockSpec((E, T * E), lambda i: (0, 0)),      # replicate (resident)
                pl.BlockSpec((T * E, T), lambda i: (0, 0)),      # selector  (resident)
                pl.BlockSpec((E, T), lambda i: (0, 0)),          # W1a^T     (resident)
                pl.BlockSpec((E, T), lambda i: (0, 0)),          # W1b^T     (resident)
                pl.BlockSpec((T, 1), lambda i: (0, 0)),          # BN scale  (resident)
                pl.BlockSpec((T, 1), lambda i: (0, 0)),          # BN shift  (resident)
            ],
            out_specs=pl.BlockSpec((T, bb), lambda i: (0, i)),   # lane-dense block
            compiler_params=pltpu.CompilerParams(
                dimension_semantics=("parallel",),
                vmem_limit_bytes=32 * 1024 * 1024,
            ),
        )(e1, e2, t1_mat, rep, sel, w1a, w1b, scale, shift)

        if transposed_output:
            return out_t             # (T, B): skip the tiny host-side transpose
        return out_t.T               # (B, T): the module's output contract

    return forward


def reference(emb1, emb2, params):
    """Pure-JAX (f32) transcription of the PyTorch forward (eval mode)."""
    B, _one, E = emb1.shape
    T = int(params["tensor_dim"])
    e1 = emb1.reshape(B, E)
    e2 = emb2.reshape(B, E)
    lin = jnp.concatenate([e1, e2], 1) @ params["W1_w"].T + params["W1_b"]
    M = e1 @ params["T1"].reshape(E, E * T)                      # (B, E*T)
    tp = jnp.einsum("bme,be->bm", M.reshape(B, T, E), e2)        # (B, T)
    res = tp + lin
    eps = 1e-5
    bn = ((res - params["bn_mean"]) / jnp.sqrt(params["bn_var"] + eps)
          * params["bn_gamma"] + params["bn_beta"])
    return jnp.tanh(bn)


if __name__ == "__main__":
    B, E, T = 300, 32, 8    # batch, embedding_size, tensor_dim

    key = jax.random.PRNGKey(0)
    k_t1, k_w, k_b, k_x1, k_x2 = jax.random.split(key, 5)

    params = {
        "tensor_dim": T,
        # T1.data.normal_(mean=0.0, std=0.02)
        "T1": 0.02 * jax.random.normal(k_t1, (E * E * T,), jnp.float32),
        # nn.Linear(2E, T) default-style init (uniform, deterministic here)
        "W1_w": jax.random.uniform(k_w, (T, 2 * E), jnp.float32, -1.0, 1.0)
                / jnp.sqrt(2.0 * E),
        "W1_b": jax.random.uniform(k_b, (T,), jnp.float32, -1.0, 1.0)
                / jnp.sqrt(2.0 * E),
        # BatchNorm1d(T) default parameters / running stats
        "bn_gamma": jnp.ones((T,), jnp.float32),
        "bn_beta": jnp.zeros((T,), jnp.float32),
        "bn_mean": jnp.zeros((T,), jnp.float32),
        "bn_var": jnp.ones((T,), jnp.float32),
    }

    emb1 = jax.random.normal(k_x1, (B, 1, E), jnp.float32)
    emb2 = jax.random.normal(k_x2, (B, 1, E), jnp.float32)

    # Small lane-aligned tile so the example exercises a multi-step grid and the
    # masked ragged tail (300 = 2*128 + 44) without any host-side padding.
    forward = make_ntn_forward(params, block_b=128)
    out = jax.block_until_ready(forward(emb1, emb2))
    assert out.shape == (B, T)

    ref = reference(emb1, emb2, params)
    # bf16 matmul operands -> slightly looser tolerance than pure f32
    np.testing.assert_allclose(np.asarray(out), np.asarray(ref),
                               rtol=2e-2, atol=2e-2)
    print("KERNEL_OK")
</pallas_src>

<mosaic_0001>
module attributes {stable_mosaic.version = 11 : i64} {
  func.func @ntn_kernel(%arg0: i32, %arg1: memref<128x32xf32, #tpu.memory_space<vmem>>, %arg2: memref<128x32xf32, #tpu.memory_space<vmem>>, %arg3: memref<32x256xbf16, #tpu.memory_space<vmem>>, %arg4: memref<32x256xbf16, #tpu.memory_space<vmem>>, %arg5: memref<256x8xbf16, #tpu.memory_space<vmem>>, %arg6: memref<32x8xbf16, #tpu.memory_space<vmem>>, %arg7: memref<32x8xbf16, #tpu.memory_space<vmem>>, %arg8: memref<8x1xf32, #tpu.memory_space<vmem>>, %arg9: memref<8x1xf32, #tpu.memory_space<vmem>>, %arg10: memref<8x128xf32, #tpu.memory_space<vmem>>) attributes {dimension_semantics = [#tpu.dimension_semantics<parallel>], iteration_bounds = array<i64: 3>, scalar_prefetch = 0 : i64, scratch_operands = 0 : i64, tpu.core_type = #tpu.core_type<tc>, window_params = [{transform_indices = @transform_0, window_bounds = array<i64: 128, 32>}, {transform_indices = @transform_1, window_bounds = array<i64: 128, 32>}, {pipeline_mode = #tpu.pipeline_mode<synchronous>, transform_indices = @transform_2, window_bounds = array<i64: 32, 256>}, {pipeline_mode = #tpu.pipeline_mode<synchronous>, transform_indices = @transform_3, window_bounds = array<i64: 32, 256>}, {pipeline_mode = #tpu.pipeline_mode<synchronous>, transform_indices = @transform_4, window_bounds = array<i64: 256, 8>}, {pipeline_mode = #tpu.pipeline_mode<synchronous>, transform_indices = @transform_5, window_bounds = array<i64: 32, 8>}, {pipeline_mode = #tpu.pipeline_mode<synchronous>, transform_indices = @transform_6, window_bounds = array<i64: 32, 8>}, {pipeline_mode = #tpu.pipeline_mode<synchronous>, transform_indices = @transform_7, window_bounds = array<i64: 8, 1>}, {pipeline_mode = #tpu.pipeline_mode<synchronous>, transform_indices = @transform_8, window_bounds = array<i64: 8, 1>}, {transform_indices = @transform_9, window_bounds = array<i64: 8, 128>}]} {
    %c0 = arith.constant 0 : index
    %c0_0 = arith.constant 0 : index
    %0 = vector.load %arg1[%c0, %c0_0] : memref<128x32xf32, #tpu.memory_space<vmem>>, vector<128x32xf32>
    %1 = arith.truncf %0 : vector<128x32xf32> to vector<128x32xbf16>
    %c0_1 = arith.constant 0 : index
    %c0_2 = arith.constant 0 : index
    %2 = vector.load %arg2[%c0_1, %c0_2] : memref<128x32xf32, #tpu.memory_space<vmem>>, vector<128x32xf32>
    %3 = arith.truncf %2 : vector<128x32xf32> to vector<128x32xbf16>
    %c0_3 = arith.constant 0 : index
    %c0_4 = arith.constant 0 : index
    %4 = vector.load %arg3[%c0_3, %c0_4] : memref<32x256xbf16, #tpu.memory_space<vmem>>, vector<32x256xbf16>
    %cst = arith.constant dense<0.000000e+00> : vector<128x256xf32>
    %5 = tpu.matmul %1, %4, %cst {dimension_numbers = #tpu.dot_dimension_numbers<[1], [0], [0], [1], [0, 0, 1, 1], [], []>} : vector<128x32xbf16>, vector<32x256xbf16>, vector<128x256xf32> -> vector<128x256xf32>
    %c0_5 = arith.constant 0 : index
    %c0_6 = arith.constant 0 : index
    %6 = vector.load %arg4[%c0_5, %c0_6] : memref<32x256xbf16, #tpu.memory_space<vmem>>, vector<32x256xbf16>
    %cst_7 = arith.constant dense<0.000000e+00> : vector<128x256xf32>
    %7 = tpu.matmul %3, %6, %cst_7 {dimension_numbers = #tpu.dot_dimension_numbers<[1], [0], [0], [1], [0, 0, 1, 1], [], []>} : vector<128x32xbf16>, vector<32x256xbf16>, vector<128x256xf32> -> vector<128x256xf32>
    %8 = arith.mulf %5, %7 : vector<128x256xf32>
    %9 = arith.truncf %8 : vector<128x256xf32> to vector<128x256xbf16>
    %c0_8 = arith.constant 0 : index
    %c0_9 = arith.constant 0 : index
    %10 = vector.load %arg5[%c0_8, %c0_9] : memref<256x8xbf16, #tpu.memory_space<vmem>>, vector<256x8xbf16>
    %cst_10 = arith.constant dense<0.000000e+00> : vector<128x8xf32>
    %11 = tpu.matmul %9, %10, %cst_10 {dimension_numbers = #tpu.dot_dimension_numbers<[1], [0], [0], [1], [0, 0, 1, 1], [], []>} : vector<128x256xbf16>, vector<256x8xbf16>, vector<128x8xf32> -> vector<128x8xf32>
    %c0_11 = arith.constant 0 : index
    %c0_12 = arith.constant 0 : index
    %12 = vector.load %arg6[%c0_11, %c0_12] : memref<32x8xbf16, #tpu.memory_space<vmem>>, vector<32x8xbf16>
    %cst_13 = arith.constant dense<0.000000e+00> : vector<128x8xf32>
    %13 = tpu.matmul %1, %12, %cst_13 {dimension_numbers = #tpu.dot_dimension_numbers<[1], [0], [0], [1], [0, 0, 1, 1], [], []>} : vector<128x32xbf16>, vector<32x8xbf16>, vector<128x8xf32> -> vector<128x8xf32>
    %14 = arith.addf %11, %13 : vector<128x8xf32>
    %c0_14 = arith.constant 0 : index
    %c0_15 = arith.constant 0 : index
    %15 = vector.load %arg7[%c0_14, %c0_15] : memref<32x8xbf16, #tpu.memory_space<vmem>>, vector<32x8xbf16>
    %cst_16 = arith.constant dense<0.000000e+00> : vector<128x8xf32>
    %16 = tpu.matmul %3, %15, %cst_16 {dimension_numbers = #tpu.dot_dimension_numbers<[1], [0], [0], [1], [0, 0, 1, 1], [], []>} : vector<128x32xbf16>, vector<32x8xbf16>, vector<128x8xf32> -> vector<128x8xf32>
    %17 = arith.addf %14, %16 : vector<128x8xf32>
    %18 = tpu.transpose %17, [1, 0] : vector<128x8xf32> -> vector<8x128xf32>
    %c0_17 = arith.constant 0 : index
    %c0_18 = arith.constant 0 : index
    %19 = vector.load %arg8[%c0_17, %c0_18] : memref<8x1xf32, #tpu.memory_space<vmem>>, vector<8x1xf32>
    %20 = vector.broadcast %19 : vector<8x1xf32> to vector<8x128xf32>
    %21 = arith.mulf %18, %20 : vector<8x128xf32>
    %c0_19 = arith.constant 0 : index
    %c0_20 = arith.constant 0 : index
    %22 = vector.load %arg9[%c0_19, %c0_20] : memref<8x1xf32, #tpu.memory_space<vmem>>, vector<8x1xf32>
    %23 = vector.broadcast %22 : vector<8x1xf32> to vector<8x128xf32>
    %24 = arith.addf %21, %23 : vector<8x128xf32>
    %25 = math.tanh %24 : vector<8x128xf32>
    %c0_21 = arith.constant 0 : index
    %c0_22 = arith.constant 0 : index
    %26 = vector.load %arg10[%c0_21, %c0_22] : memref<8x128xf32, #tpu.memory_space<vmem>>, vector<8x128xf32>
    tpu.vector_store %arg10[%c0_21, %c0_22], %25 {strides = array<i32>} : memref<8x128xf32, #tpu.memory_space<vmem>>, vector<8x128xf32>,
    return
  }
  func.func @transform_0(%arg0: i32) -> (i32, i32) {
    %c0_i32 = arith.constant 0 : i32
    %c0_i32_0 = arith.constant 0 : i32
    return %arg0, %c0_i32 : i32, i32
  }
  func.func @transform_1(%arg0: i32) -> (i32, i32) {
    %c0_i32 = arith.constant 0 : i32
    %c0_i32_0 = arith.constant 0 : i32
    return %arg0, %c0_i32 : i32, i32
  }
  func.func @transform_2(%arg0: i32) -> (i32, i32) {
    %c0_i32 = arith.constant 0 : i32
    %c0_i32_0 = arith.constant 0 : i32
    %c0_i32_1 = arith.constant 0 : i32
    return %c0_i32, %c0_i32_0 : i32, i32
  }
  func.func @transform_3(%arg0: i32) -> (i32, i32) {
    %c0_i32 = arith.constant 0 : i32
    %c0_i32_0 = arith.constant 0 : i32
    %c0_i32_1 = arith.constant 0 : i32
    return %c0_i32, %c0_i32_0 : i32, i32
  }
  func.func @transform_4(%arg0: i32) -> (i32, i32) {
    %c0_i32 = arith.constant 0 : i32
    %c0_i32_0 = arith.constant 0 : i32
    %c0_i32_1 = arith.constant 0 : i32
    return %c0_i32, %c0_i32_0 : i32, i32
  }
  func.func @transform_5(%arg0: i32) -> (i32, i32) {
    %c0_i32 = arith.constant 0 : i32
    %c0_i32_0 = arith.constant 0 : i32
    %c0_i32_1 = arith.constant 0 : i32
    return %c0_i32, %c0_i32_0 : i32, i32
  }
  func.func @transform_6(%arg0: i32) -> (i32, i32) {
    %c0_i32 = arith.constant 0 : i32
    %c0_i32_0 = arith.constant 0 : i32
    %c0_i32_1 = arith.constant 0 : i32
    return %c0_i32, %c0_i32_0 : i32, i32
  }
  func.func @transform_7(%arg0: i32) -> (i32, i32) {
    %c0_i32 = arith.constant 0 : i32
    %c0_i32_0 = arith.constant 0 : i32
    %c0_i32_1 = arith.constant 0 : i32
    return %c0_i32, %c0_i32_0 : i32, i32
  }
  func.func @transform_8(%arg0: i32) -> (i32, i32) {
    %c0_i32 = arith.constant 0 : i32
    %c0_i32_0 = arith.constant 0 : i32
    %c0_i32_1 = arith.constant 0 : i32
    return %c0_i32, %c0_i32_0 : i32, i32
  }
  func.func @transform_9(%arg0: i32) -> (i32, i32) {
    %c0_i32 = arith.constant 0 : i32
    %c0_i32_0 = arith.constant 0 : i32
    return %c0_i32, %arg0 : i32, i32
  }
}

</mosaic_0001>

<llo_original>
// kernel: forward.1
$region0: #{forward.1}
  #allocation0 [shape = 'u32[]', space=smem, size = 0x4, offset = 0x4, fixed_abs, tag = 'smem constant byte address 0x4 - core index']
  #allocation1 [shape = 'u32[72,128]{1,0:T(1,128)}', space=vmem, size = 0x9000, scoped, tag = 'internal scratch']
  %s0 = inlined_call_operand.vmem [shape: f32[300,32], index: 0, kind: input, shape index: {}]
  %s1 = inlined_call_operand.vmem [shape: f32[300,32], index: 1, kind: input, shape index: {}]
  %s2 = inlined_call_operand.vmem [shape: bf16[32,256], index: 2, kind: input, shape index: {}]
  %s3 = inlined_call_operand.vmem [shape: bf16[32,256], index: 3, kind: input, shape index: {}]
  %s4 = inlined_call_operand.vmem [shape: bf16[256,8], index: 4, kind: input, shape index: {}]
  %s5 = inlined_call_operand.vmem [shape: bf16[32,8], index: 5, kind: input, shape index: {}]
  %s6 = inlined_call_operand.vmem [shape: bf16[32,8], index: 6, kind: input, shape index: {}]
  %s7 = inlined_call_operand.vmem [shape: f32[8,1], index: 7, kind: input, shape index: {}]
  %s8 = inlined_call_operand.vmem [shape: f32[8,1], index: 8, kind: input, shape index: {}]
  %s9 = inlined_call_operand.hbm [shape: f32[8,300], index: 9, kind: output, shape index: {}]
  %s10 = sld [smem:[#allocation0]]
  $region69: #{forward.1} parent=0
    _
  %s12 = ssub.s32 1, %s10
  %s13 = scalar_select 0, %s12, %s10
  $region1: #{forward.1} parent=0
    #allocation2 [shape = 'u8[8192]{0}', space=vmem, size = 0x2000, scoped, tag = 'output window, operand 0']
    #allocation3 [shape = 's32[2]{0}', space=sflag, size = 0x8, scoped, tag = 'scoped memory for forward.1']
    %14 = vsyncpa [#allocation3], 0
    %s15 = scalar_lea.sflag [#allocation3], 1
    %16 = vsyncpa %s15, 0
    loop: start=0, step=1, limit=5
    $region2: #{forward.1} parent=1 // loop_pre_header
      _
    $region3: #{forward.1} parent=1 // loop_header
      %s18 = sphi 0, %s22
      %p19 = scmp.ge.s32.totalorder %s18, 5
      %s28 = sphi 0, %s30
      %s31 = sphi 0, %s28
      %s32 = sphi 0, %s31
      %s48 = sphi 0, %s32
      %s54 = sphi 0, %s56
      %s57 = sphi 0, %s54
      %s58 = sphi 0, %s57
      %s74 = sphi 0, %s58
      %s78 = sphi 0, %s78
      %s80 = sphi 0, %s78
      %s81 = sphi 0, %s80
      %s95 = sphi 0, %s81
      %s99 = sphi 0, %s99
      %s101 = sphi 0, %s99
      %s102 = sphi 0, %s101
      %s116 = sphi 0, %s102
      %s120 = sphi 0, %s120
      %s122 = sphi 0, %s120
      %s123 = sphi 0, %s122
      %s137 = sphi 0, %s123
      %s141 = sphi 0, %s141
      %s143 = sphi 0, %s141
      %s144 = sphi 0, %s143
      %s158 = sphi 0, %s144
      %s162 = sphi 0, %s162
      %s164 = sphi 0, %s162
      %s165 = sphi 0, %s164
      %s179 = sphi 0, %s165
      %s183 = sphi 0, %s183
      %s185 = sphi 0, %s183
      %s186 = sphi 0, %s185
      %s200 = sphi 0, %s186
      %s204 = sphi 0, %s204
      %s206 = sphi 0, %s204
      %s207 = sphi 0, %s206
      %s221 = sphi 0, %s207
      %s227 = sphi 0, %s229
      %s230 = sphi 0, %s227
      %s231 = sphi 0, %s230
      %s247 = sphi 0, %s231
    $region4: #{forward.1} parent=1 // loop_header_branch
      %21 = sbr.rel (%p19) target = $region8
    $region5: #{forward.1} parent=1 // loop_body
      %s23 = ssub.s32 %s18, 1
      %s24 = ssub.s32 %s18, 2
      %s25 = sadd.s32 %s18, 1
      %s26 = ssub.s32 %s18, %s25
      %p27 = scmp.eq.s32.totalorder %s26, 0
      %s29 = sadd.s32 %s28, 1
      %s30 = scalar_select %p27, %s28, %s29
      %p33 = pneg %p27
      %p34 = scmp.eq.s32.totalorder %s18, 2
      %p35 = por %p33, %p34
      %p36 = scmp.ne.s32.totalorder %s28, %s31
      %p37 = scmp.eq.s32.totalorder %s18, 0
      %p38 = por %p36, %p37
      %p39 = scmp.ne.s32.totalorder %s28, %s31
      %p40 = scmp.eq.s32.totalorder %s23, 2
      %p41 = por %p39, %p40
      %p42 = scmp.ne.s32.totalorder %s31, %s32
      %p43 = scmp.eq.s32.totalorder %s23, 0
      %p44 = por %p42, %p43
      %p45 = scmp.ne.s32.totalorder %s31, %s32
      %p46 = scmp.eq.s32.totalorder %s24, 2
      %p47 = por %p45, %p46
      %p49 = scmp.ne.s32.totalorder %s32, %s48
      %p50 = scmp.eq.s32.totalorder %s24, 0
      %p51 = por %p49, %p50
      %s52 = ssub.s32 %s18, %s25
      %p53 = scmp.eq.s32.totalorder %s52, 0
      %s55 = sadd.s32 %s54, 1
      %s56 = scalar_select %p53, %s54, %s55
      %p59 = pneg %p53
      %p60 = scmp.eq.s32.totalorder %s18, 2
      %p61 = por %p59, %p60
      %p62 = scmp.ne.s32.totalorder %s54, %s57
      %p63 = scmp.eq.s32.totalorder %s18, 0
      %p64 = por %p62, %p63
      %p65 = scmp.ne.s32.totalorder %s54, %s57
      %p66 = scmp.eq.s32.totalorder %s23, 2
      %p67 = por %p65, %p66
      %p68 = scmp.ne.s32.totalorder %s57, %s58
      %p69 = scmp.eq.s32.totalorder %s23, 0
      %p70 = por %p68, %p69
      %p71 = scmp.ne.s32.totalorder %s57, %s58
      %p72 = scmp.eq.s32.totalorder %s24, 2
      %p73 = por %p71, %p72
      %p75 = scmp.ne.s32.totalorder %s58, %s74
      %p76 = scmp.eq.s32.totalorder %s24, 0
      %p77 = por %p75, %p76
      %s79 = sadd.s32 %s78, 1
      %p82 = scmp.eq.s32.totalorder %s18, 2
      %p83 = scmp.ne.s32.totalorder %s78, %s80
      %p84 = scmp.eq.s32.totalorder %s18, 0
      %p85 = por %p83, %p84
      %p86 = scmp.ne.s32.totalorder %s78, %s80
      %p87 = scmp.eq.s32.totalorder %s23, 2
      %p88 = por %p86, %p87
      %p89 = scmp.ne.s32.totalorder %s80, %s81
      %p90 = scmp.eq.s32.totalorder %s23, 0
      %p91 = por %p89, %p90
      %p92 = scmp.ne.s32.totalorder %s80, %s81
      %p93 = scmp.eq.s32.totalorder %s24, 2
      %p94 = por %p92, %p93
      %p96 = scmp.ne.s32.totalorder %s81, %s95
      %p97 = scmp.eq.s32.totalorder %s24, 0
      %p98 = por %p96, %p97
      %s100 = sadd.s32 %s99, 1
      %p103 = scmp.eq.s32.totalorder %s18, 2
      %p104 = scmp.ne.s32.totalorder %s99, %s101
      %p105 = scmp.eq.s32.totalorder %s18, 0
      %p106 = por %p104, %p105
      %p107 = scmp.ne.s32.totalorder %s99, %s101
      %p108 = scmp.eq.s32.totalorder %s23, 2
      %p109 = por %p107, %p108
      %p110 = scmp.ne.s32.totalorder %s101, %s102
      %p111 = scmp.eq.s32.totalorder %s23, 0
      %p112 = por %p110, %p111
      %p113 = scmp.ne.s32.totalorder %s101, %s102
      %p114 = scmp.eq.s32.totalorder %s24, 2
      %p115 = por %p113, %p114
      %p117 = scmp.ne.s32.totalorder %s102, %s116
      %p118 = scmp.eq.s32.totalorder %s24, 0
      %p119 = por %p117, %p118
      %s121 = sadd.s32 %s120, 1
      %p124 = scmp.eq.s32.totalorder %s18, 2
      %p125 = scmp.ne.s32.totalorder %s120, %s122
      %p126 = scmp.eq.s32.totalorder %s18, 0
      %p127 = por %p125, %p126
      %p128 = scmp.ne.s32.totalorder %s120, %s122
      %p129 = scmp.eq.s32.totalorder %s23, 2
      %p130 = por %p128, %p129
      %p131 = scmp.ne.s32.totalorder %s122, %s123
      %p132 = scmp.eq.s32.totalorder %s23, 0
      %p133 = por %p131, %p132
      %p134 = scmp.ne.s32.totalorder %s122, %s123
      %p135 = scmp.eq.s32.totalorder %s24, 2
      %p136 = por %p134, %p135
      %p138 = scmp.ne.s32.totalorder %s123, %s137
      %p139 = scmp.eq.s32.totalorder %s24, 0
      %p140 = por %p138, %p139
      %s142 = sadd.s32 %s141, 1
      %p145 = scmp.eq.s32.totalorder %s18, 2
      %p146 = scmp.ne.s32.totalorder %s141, %s143
      %p147 = scmp.eq.s32.totalorder %s18, 0
      %p148 = por %p146, %p147
      %p149 = scmp.ne.s32.totalorder %s141, %s143
      %p150 = scmp.eq.s32.totalorder %s23, 2
      %p151 = por %p149, %p150
      %p152 = scmp.ne.s32.totalorder %s143, %s144
      %p153 = scmp.eq.s32.totalorder %s23, 0
      %p154 = por %p152, %p153
      %p155 = scmp.ne.s32.totalorder %s143, %s144
      %p156 = scmp.eq.s32.totalorder %s24, 2
      %p157 = por %p155, %p156
      %p159 = scmp.ne.s32.totalorder %s144, %s158
      %p160 = scmp.eq.s32.totalorder %s24, 0
      %p161 = por %p159, %p160
      %s163 = sadd.s32 %s162, 1
      %p166 = scmp.eq.s32.totalorder %s18, 2
      %p167 = scmp.ne.s32.totalorder %s162, %s164
      %p168 = scmp.eq.s32.totalorder %s18, 0
      %p169 = por %p167, %p168
      %p170 = scmp.ne.s32.totalorder %s162, %s164
      %p171 = scmp.eq.s32.totalorder %s23, 2
      %p172 = por %p170, %p171
      %p173 = scmp.ne.s32.totalorder %s164, %s165
      %p174 = scmp.eq.s32.totalorder %s23, 0
      %p175 = por %p173, %p174
      %p176 = scmp.ne.s32.totalorder %s164, %s165
      %p177 = scmp.eq.s32.totalorder %s24, 2
      %p178 = por %p176, %p177
      %p180 = scmp.ne.s32.totalorder %s165, %s179
      %p181 = scmp.eq.s32.totalorder %s24, 0
      %p182 = por %p180, %p181
      %s184 = sadd.s32 %s183, 1
      %p187 = scmp.eq.s32.totalorder %s18, 2
      %p188 = scmp.ne.s32.totalorder %s183, %s185
      %p189 = scmp.eq.s32.totalorder %s18, 0
      %p190 = por %p188, %p189
      %p191 = scmp.ne.s32.totalorder %s183, %s185
      %p192 = scmp.eq.s32.totalorder %s23, 2
      %p193 = por %p191, %p192
      %p194 = scmp.ne.s32.totalorder %s185, %s186
      %p195 = scmp.eq.s32.totalorder %s23, 0
      %p196 = por %p194, %p195
      %p197 = scmp.ne.s32.totalorder %s185, %s186
      %p198 = scmp.eq.s32.totalorder %s24, 2
      %p199 = por %p197, %p198
      %p201 = scmp.ne.s32.totalorder %s186, %s200
      %p202 = scmp.eq.s32.totalorder %s24, 0
      %p203 = por %p201, %p202
      %s205 = sadd.s32 %s204, 1
      %p208 = scmp.eq.s32.totalorder %s18, 2
      %p209 = scmp.ne.s32.totalorder %s204, %s206
      %p210 = scmp.eq.s32.totalorder %s18, 0
      %p211 = por %p209, %p210
      %p212 = scmp.ne.s32.totalorder %s204, %s206
      %p213 = scmp.eq.s32.totalorder %s23, 2
      %p214 = por %p212, %p213
      %p215 = scmp.ne.s32.totalorder %s206, %s207
      %p216 = scmp.eq.s32.totalorder %s23, 0
      %p217 = por %p215, %p216
      %p218 = scmp.ne.s32.totalorder %s206, %s207
      %p219 = scmp.eq.s32.totalorder %s24, 2
      %p220 = por %p218, %p219
      %p222 = scmp.ne.s32.totalorder %s207, %s221
      %p223 = scmp.eq.s32.totalorder %s24, 0
      %p224 = por %p222, %p223
      %s225 = ssub.s32 %s18, %s25
      %p226 = scmp.eq.s32.totalorder %s225, 0
      %s228 = sadd.s32 %s227, 1
      %s229 = scalar_select %p226, %s227, %s228
      %p232 = pneg %p226
      %p233 = scmp.eq.s32.totalorder %s18, 2
      %p234 = por %p232, %p233
      %p235 = scmp.ne.s32.totalorder %s227, %s230
      %p236 = scmp.eq.s32.totalorder %s18, 0
      %p237 = por %p235, %p236
      %p238 = scmp.ne.s32.totalorder %s227, %s230
      %p239 = scmp.eq.s32.totalorder %s23, 2
      %p240 = por %p238, %p239
      %p241 = scmp.ne.s32.totalorder %s230, %s231
      %p242 = scmp.eq.s32.totalorder %s23, 0
      %p243 = por %p241, %p242
      %p244 = scmp.ne.s32.totalorder %s230, %s231
      %p245 = scmp.eq.s32.totalorder %s24, 2
      %p246 = por %p244, %p245
      %p248 = scmp.ne.s32.totalorder %s231, %s247
      %p249 = scmp.eq.s32.totalorder %s24, 0
      %p250 = por %p248, %p249
      %p251 = scmp.le.s32.totalorder 1, %s18
      %p252 = scmp.lt.s32.totalorder %s18, 4
      %p253 = pnand %p251, %p252
      %p254 = pneg %p253
      // Predicated region
      $region9: #{forward.1} parent=5 // pred_check
        _
      $region10: #{forward.1} parent=5 // pred_check_branch
        %256 = sbr.rel (%p253) target = $region12
      $region11: #{forward.1} parent=5 // pred_region
        %s257 = ssub.s32 %s18, 1
        // Predicated region
        $region13: #{forward.1} parent=11 // pred_check
          %p258 = pneg %p91
        $region14: #{forward.1} parent=11 // pred_check_branch
          %260 = sbr.rel (%p258) target = $region16
        $region15: #{forward.1} parent=11 // pred_region
          _
        $region16: #{forward.1} parent=11 // pred_fallthru
          _
        // Predicated region
        $region17: #{forward.1} parent=11 // pred_check
          %p261 = pneg %p112
        $region18: #{forward.1} parent=11 // pred_check_branch
          %263 = sbr.rel (%p261) target = $region20
        $region19: #{forward.1} parent=11 // pred_region
          _
        $region20: #{forward.1} parent=11 // pred_fallthru
          _
        // Predicated region
        $region21: #{forward.1} parent=11 // pred_check
          %p264 = pneg %p133
        $region22: #{forward.1} parent=11 // pred_check_branch
          %266 = sbr.rel (%p264) target = $region24
        $region23: #{forward.1} parent=11 // pred_region
          _
        $region24: #{forward.1} parent=11 // pred_fallthru
          _
        // Predicated region
        $region25: #{forward.1} parent=11 // pred_check
          %p267 = pneg %p154
        $region26: #{forward.1} parent=11 // pred_check_branch
          %269 = sbr.rel (%p267) target = $region28
        $region27: #{forward.1} parent=11 // pred_region
          _
        $region28: #{forward.1} parent=11 // pred_fallthru
          _
        // Predicated region
        $region29: #{forward.1} parent=11 // pred_check
          %p270 = pneg %p175
        $region30: #{forward.1} parent=11 // pred_check_branch
          %272 = sbr.rel (%p270) target = $region32
        $region31: #{forward.1} parent=11 // pred_region
          _
        $region32: #{forward.1} parent=11 // pred_fallthru
          _
        // Predicated region
        $region33: #{forward.1} parent=11 // pred_check
          %p273 = pneg %p196
        $region34: #{forward.1} parent=11 // pred_check_branch
          %275 = sbr.rel (%p273) target = $region36
        $region35: #{forward.1} parent=11 // pred_region
          _
        $region36: #{forward.1} parent=11 // pred_fallthru
          _
        // Predicated region
        $region37: #{forward.1} parent=11 // pred_check
          %p276 = pneg %p217
        $region38: #{forward.1} parent=11 // pred_check_branch
          %278 = sbr.rel (%p276) target = $region40
        $region39: #{forward.1} parent=11 // pred_region
          _
        $region40: #{forward.1} parent=11 // pred_fallthru
          _
      $region12: #{forward.1} parent=5 // pred_fallthru
        _
      %p279 = scmp.lt.s32.totalorder %s18, 3
      // Predicated region
      $region41: #{forward.1} parent=5 // pred_check
        %p280 = pneg %p279
      $region42: #{forward.1} parent=5 // pred_check_branch
        %282 = sbr.rel (%p280) target = $region44
      $region43: #{forward.1} parent=5 // pred_region
        // Predicated region
        $region45: #{forward.1} parent=43 // pred_check
          %p283 = pneg %p38
        $region46: #{forward.1} parent=43 // pred_check_branch
          %285 = sbr.rel (%p283) target = $region48
        $region47: #{forward.1} parent=43 // pred_region
          %s286 = smul.u32 16, %s18
          %s287 = ssub.s32 38, %s286
          %p288 = scmp.lt.s32.totalorder %s287, 16
          %s289 = scalar_select %p288, %s287, 16
          %s290 = smul.u32 8, %s289
          %p291 = scmp.lt.s32.totalorder %s286, 37
          %s292 = scalar_select %p291, %s286, 37
          %s293 = smul.addr %s292, 8
          %s294 = scalar_lea.vmem %s0, %s293
          %s295 = smul.u32 16, %s18
          %s296 = ssub.s32 38, %s295
          %p297 = scmp.lt.s32.totalorder %s296, 16
          %s298 = scalar_select %p297, %s296, 16
          %s299 = smul.u32 8, %s298
        $region48: #{forward.1} parent=43 // pred_fallthru
          _
        // Predicated region
        $region49: #{forward.1} parent=43 // pred_check
          %p300 = pneg %p64
        $region50: #{forward.1} parent=43 // pred_check_branch
          %302 = sbr.rel (%p300) target = $region52
        $region51: #{forward.1} parent=43 // pred_region
          %s303 = smul.u32 16, %s18
          %s304 = ssub.s32 38, %s303
          %p305 = scmp.lt.s32.totalorder %s304, 16
          %s306 = scalar_select %p305, %s304, 16
          %s307 = smul.u32 8, %s306
          %p308 = scmp.lt.s32.totalorder %s303, 37
          %s309 = scalar_select %p308, %s303, 37
          %s310 = smul.addr %s309, 8
          %s311 = scalar_lea.vmem %s1, %s310
          %s312 = smul.u32 16, %s18
          %s313 = ssub.s32 38, %s312
          %p314 = scmp.lt.s32.totalorder %s313, 16
          %s315 = scalar_select %p314, %s313, 16
          %s316 = smul.u32 8, %s315
        $region52: #{forward.1} parent=43 // pred_fallthru
          _
      $region44: #{forward.1} parent=5 // pred_fallthru
        _
      %p317 = scmp.le.s32.totalorder 1, %s18
      %p318 = scmp.lt.s32.totalorder %s18, 4
      %p319 = pnand %p317, %p318
      %p320 = pneg %p319
      // Predicated region
      $region53: #{forward.1} parent=5 // pred_check
        _
      $region54: #{forward.1} parent=5 // pred_check_branch
        %322 = sbr.rel (%p319) target = $region56
      $region55: #{forward.1} parent=5 // pred_region
        %s323 = ssub.s32 %s18, 1
        %s324 = smul.u32 16, %s23
        %s325 = ssub.s32 38, %s324
        %p326 = scmp.lt.s32.totalorder %s325, 16
        %s327 = scalar_select %p326, %s325, 16
        %s328 = smul.u32 8, %s327
        %p329 = scmp.lt.s32.totalorder %s324, 37
        %s330 = scalar_select %p329, %s324, 37
        %s331 = smul.addr %s330, 8
        %s332 = scalar_lea.vmem %s0, %s331
        %p333 = pneg %p44
        %p334 = pneg %p41
        %s335 = smul.u32 16, %s23
        %s336 = ssub.s32 38, %s335
        %p337 = scmp.lt.s32.totalorder %s336, 16
        %s338 = scalar_select %p337, %s336, 16
        %s339 = smul.u32 8, %s338
        %p340 = scmp.lt.s32.totalorder %s335, 37
        %s341 = scalar_select %p340, %s335, 37
        %s342 = smul.addr %s341, 8
        %s343 = scalar_lea.vmem %s1, %s342
        %p344 = pneg %p70
        %p345 = pneg %p67
        %p346 = pneg %p91
        %p347 = pneg %p88
        %p348 = pneg %p112
        %p349 = pneg %p109
        %p350 = pneg %p133
        %p351 = pneg %p130
        %p352 = pneg %p154
        %p353 = pneg %p151
        %p354 = pneg %p175
        %p355 = pneg %p172
        %p356 = pneg %p196
        %p357 = pneg %p193
        %p358 = pneg %p217
        %p359 = pneg %p214
        %p360 = pneg %p243
        %p361 = pneg %p240
        %s362 = sand.u32 %s230, 1
        %s363 = scalar_lea.sflag [#allocation3], %s362
        %s364 = sand.u32 %s230, 1
        %s365 = smul.addr %s364, 8
        %s366 = scalar_lea.vmem [#allocation2], %s365
        %s367 = smul.u32 16, %s23
        %s368 = ssub.s32 38, %s367
        %p369 = scmp.lt.s32.totalorder %s368, 16
        %s370 = scalar_select %p369, %s368, 16
        %s371 = smul.u32 8, %s370
        %p372 = scmp.lt.s32.totalorder %s367, 37
        %s373 = scalar_select %p372, %s367, 37
        %s374 = smul.addr %s373, 8
        %s375 = scalar_lea.vmem %s0, %s374
        %s376 = smul.u32 16, %s23
        %s377 = ssub.s32 38, %s376
        %p378 = scmp.lt.s32.totalorder %s377, 16
        %s379 = scalar_select %p378, %s377, 16
        %s380 = smul.u32 8, %s379
        %s381 = smul.u32 16, %s23
        %s382 = ssub.s32 38, %s381
        %p383 = scmp.lt.s32.totalorder %s382, 16
        %s384 = scalar_select %p383, %s382, 16
        %s385 = smul.u32 8, %s384
        %p386 = scmp.lt.s32.totalorder %s381, 37
        %s387 = scalar_select %p386, %s381, 37
        %s388 = smul.addr %s387, 8
        %s389 = scalar_lea.vmem %s1, %s388
        %s390 = smul.u32 16, %s23
        %s391 = ssub.s32 38, %s390
        %p392 = scmp.lt.s32.totalorder %s391, 16
        %s393 = scalar_select %p392, %s391, 16
        %s394 = smul.u32 8, %s393
        %v396 = vld [vmem:[%s375] sm:$0xff]
        %v397 = vld [vmem:[%s375 + $0x8] sm:$0xff]
        %v398 = vld [vmem:[%s375 + $0x10] sm:$0xff]
        %v399 = vld [vmem:[%s375 + $0x18] sm:$0xff]
        %v400 = vld [vmem:[%s375 + $0x20] sm:$0xff]
        %v401 = vld [vmem:[%s375 + $0x28] sm:$0xff]
        %v402 = vld [vmem:[%s375 + $0x30] sm:$0xff]
        %v403 = vld [vmem:[%s375 + $0x38] sm:$0xff]
        %v404 = vld [vmem:[%s375 + $0x40] sm:$0xff]
        %v405 = vld [vmem:[%s375 + $0x48] sm:$0xff]
        %v406 = vld [vmem:[%s375 + $0x50] sm:$0xff]
        %v407 = vld [vmem:[%s375 + $0x58] sm:$0xff]
        %v408 = vld [vmem:[%s375 + $0x60] sm:$0xff]
        %v409 = vld [vmem:[%s375 + $0x68] sm:$0xff]
        %v410 = vld [vmem:[%s375 + $0x70] sm:$0xff]
        %v411 = vld [vmem:[%s375 + $0x78] sm:$0xff]
        %v412 = vpack.c.bf16 %v397, %v396
        %v413 = vpack.c.bf16 %v399, %v398
        %v414 = vpack.c.bf16 %v401, %v400
        %v415 = vpack.c.bf16 %v403, %v402
        %v416 = vpack.c.bf16 %v405, %v404
        %v417 = vpack.c.bf16 %v407, %v406
        %v418 = vpack.c.bf16 %v409, %v408
        %v419 = vpack.c.bf16 %v411, %v410
        %v420 = vld [vmem:[%s389] sm:$0xff]
        %v421 = vld [vmem:[%s389 + $0x8] sm:$0xff]
        %v422 = vld [vmem:[%s389 + $0x10] sm:$0xff]
        %v423 = vld [vmem:[%s389 + $0x18] sm:$0xff]
        %v424 = vld [vmem:[%s389 + $0x20] sm:$0xff]
        %v425 = vld [vmem:[%s389 + $0x28] sm:$0xff]
        %v426 = vld [vmem:[%s389 + $0x30] sm:$0xff]
        %v427 = vld [vmem:[%s389 + $0x38] sm:$0xff]
        %v428 = vld [vmem:[%s389 + $0x40] sm:$0xff]
        %v429 = vld [vmem:[%s389 + $0x48] sm:$0xff]
        %v430 = vld [vmem:[%s389 + $0x50] sm:$0xff]
        %v431 = vld [vmem:[%s389 + $0x58] sm:$0xff]
        %v432 = vld [vmem:[%s389 + $0x60] sm:$0xff]
        %v433 = vld [vmem:[%s389 + $0x68] sm:$0xff]
        %v434 = vld [vmem:[%s389 + $0x70] sm:$0xff]
        %v435 = vld [vmem:[%s389 + $0x78] sm:$0xff]
        %v436 = vpack.c.bf16 %v421, %v420
        %v437 = vpack.c.bf16 %v423, %v422
        %v438 = vpack.c.bf16 %v425, %v424
        %v439 = vpack.c.bf16 %v427, %v426
        %v440 = vpack.c.bf16 %v429, %v428
        %v441 = vpack.c.bf16 %v431, %v430
        %v442 = vpack.c.bf16 %v433, %v432
        %v443 = vpack.c.bf16 %v435, %v434
        %v444 = vld [vmem:[%s2] sm:$0xff]
        %v445 = vld [vmem:[%s2 + $0x8] sm:$0xff]
        %v446 = vld [vmem:[%s2 + $0x10] sm:$0xff]
        %v447 = vld [vmem:[%s2 + $0x18] sm:$0xff]
        %v452 = vunpack.c.l.b16 %v444
        %v453 = vunpack.c.h.b16 %v444
        %v454 = vunpack.c.l.b16 %v445
        %v455 = vunpack.c.h.b16 %v445
        %v456 = vunpack.c.l.b16 %v446
        %v457 = vunpack.c.h.b16 %v446
        %v458 = vunpack.c.l.b16 %v447
        %v459 = vunpack.c.h.b16 %v447
        %v460 = vpack.c.b16 %v454, %v452
        %v461 = vpack.c.b16 %v455, %v453
        %v462 = vpack.c.b16 %v458, %v456
        %v463 = vpack.c.b16 %v459, %v457
        %vm468 = vcmask 261120
        %v470 = vsel %vm468, %v412, 0
        %v473 = vsel %vm468, %v413, 0
        %v476 = vsel %vm468, %v414, 0
        %v479 = vsel %vm468, %v415, 0
        %v482 = vsel %vm468, %v416, 0
        %v485 = vsel %vm468, %v417, 0
        %v488 = vsel %vm468, %v418, 0
        %v491 = vsel %vm468, %v419, 0
        %493 = vmatpush.bf16.msra.mxu0 0
        %494 = vmatpush.bf16.msra.mxu0 0
        %495 = vmatpush.bf16.msra.mxu0 0
        %496 = vmatpush.bf16.msra.mxu0 0
        %497 = vmatpush.bf16.msra.mxu0 0
        %498 = vmatpush.bf16.msra.mxu0 0
        %499 = vmatpush.bf16.msra.mxu0 %v462
        %500 = vmatpush.bf16.msra.mxu0 %v460
        %501 = vmatmul.bf16.gmra.mxu0 %v470
        %v502 = vpop.f32.mrf.mxu0
        %v503 = vadd.f32 0.0, %v502
        %v504 = vpop.f32.mrf.mxu0
        %v505 = vadd.f32 0.0, %v504
        %506 = vmatmul.bf16.gmra.mxu0 %v473
        %v507 = vpop.f32.mrf.mxu0
        %v508 = vadd.f32 0.0, %v507
        %v509 = vpop.f32.mrf.mxu0
        %v510 = vadd.f32 0.0, %v509
        %511 = vmatmul.bf16.gmra.mxu0 %v476
        %v512 = vpop.f32.mrf.mxu0
        %v513 = vadd.f32 0.0, %v512
        %v514 = vpop.f32.mrf.mxu0
        %v515 = vadd.f32 0.0, %v514
        %516 = vmatmul.bf16.gmra.mxu0 %v479
        %v517 = vpop.f32.mrf.mxu0
        %v518 = vadd.f32 0.0, %v517
        %v519 = vpop.f32.mrf.mxu0
        %v520 = vadd.f32 0.0, %v519
        %521 = vmatmul.bf16.gmra.mxu0 %v482
        %v522 = vpop.f32.mrf.mxu0
        %v523 = vadd.f32 0.0, %v522
        %v524 = vpop.f32.mrf.mxu0
        %v525 = vadd.f32 0.0, %v524
        %526 = vmatmul.bf16.gmra.mxu0 %v485
        %v527 = vpop.f32.mrf.mxu0
        %v528 = vadd.f32 0.0, %v527
        %v529 = vpop.f32.mrf.mxu0
        %v530 = vadd.f32 0.0, %v529
        %531 = vmatmul.bf16.gmra.mxu0 %v488
        %v532 = vpop.f32.mrf.mxu0
        %v533 = vadd.f32 0.0, %v532
        %v534 = vpop.f32.mrf.mxu0
        %v535 = vadd.f32 0.0, %v534
        %536 = vmatmul.bf16.gmra.mxu0 %v491
        %v537 = vpop.f32.mrf.mxu0
        %v538 = vadd.f32 0.0, %v537
        %v539 = vpop.f32.mrf.mxu0
        %v540 = vadd.f32 0.0, %v539
        %541 = vdwg.mxu0
        %542 = vmatpush.bf16.msra.mxu0 0
        %543 = vmatpush.bf16.msra.mxu0 0
        %544 = vmatpush.bf16.msra.mxu0 0
        %545 = vmatpush.bf16.msra.mxu0 0
        %546 = vmatpush.bf16.msra.mxu0 0
        %547 = vmatpush.bf16.msra.mxu0 0
        %548 = vmatpush.bf16.msra.mxu0 %v463
        %549 = vmatpush.bf16.msra.mxu0 %v461
        %550 = vmatmul.bf16.gmra.mxu0 %v470
        %v551 = vpop.f32.mrf.mxu0
        %v552 = vadd.f32 0.0, %v551
        %v553 = vpop.f32.mrf.mxu0
        %v554 = vadd.f32 0.0, %v553
        %555 = vmatmul.bf16.gmra.mxu0 %v473
        %v556 = vpop.f32.mrf.mxu0
        %v557 = vadd.f32 0.0, %v556
        %v558 = vpop.f32.mrf.mxu0
        %v559 = vadd.f32 0.0, %v558
        %560 = vmatmul.bf16.gmra.mxu0 %v476
        %v561 = vpop.f32.mrf.mxu0
        %v562 = vadd.f32 0.0, %v561
        %v563 = vpop.f32.mrf.mxu0
        %v564 = vadd.f32 0.0, %v563
        %565 = vmatmul.bf16.gmra.mxu0 %v479
        %v566 = vpop.f32.mrf.mxu0
        %v567 = vadd.f32 0.0, %v566
        %v568 = vpop.f32.mrf.mxu0
        %v569 = vadd.f32 0.0, %v568
        %570 = vmatmul.bf16.gmra.mxu0 %v482
        %v571 = vpop.f32.mrf.mxu0
        %v572 = vadd.f32 0.0, %v571
        %v573 = vpop.f32.mrf.mxu0
        %v574 = vadd.f32 0.0, %v573
        %575 = vmatmul.bf16.gmra.mxu0 %v485
        %v576 = vpop.f32.mrf.mxu0
        %v577 = vadd.f32 0.0, %v576
        %v578 = vpop.f32.mrf.mxu0
        %v579 = vadd.f32 0.0, %v578
        %580 = vmatmul.bf16.gmra.mxu0 %v488
        %v581 = vpop.f32.mrf.mxu0
        %v582 = vadd.f32 0.0, %v581
        %v583 = vpop.f32.mrf.mxu0
        %v584 = vadd.f32 0.0, %v583
        %585 = vmatmul.bf16.gmra.mxu0 %v491
        %v586 = vpop.f32.mrf.mxu0
        %v587 = vadd.f32 0.0, %v586
        %v588 = vpop.f32.mrf.mxu0
        %v589 = vadd.f32 0.0, %v588
        %590 = vdwg.mxu0
        %v591 = vld [vmem:[%s3] sm:$0xff]
        %v592 = vld [vmem:[%s3 + $0x8] sm:$0xff]
        %v593 = vld [vmem:[%s3 + $0x10] sm:$0xff]
        %v594 = vld [vmem:[%s3 + $0x18] sm:$0xff]
        %v599 = vunpack.c.l.b16 %v591
        %v600 = vunpack.c.h.b16 %v591
        %v601 = vunpack.c.l.b16 %v592
        %v602 = vunpack.c.h.b16 %v592
        %v603 = vunpack.c.l.b16 %v593
        %v604 = vunpack.c.h.b16 %v593
        %v605 = vunpack.c.l.b16 %v594
        %v606 = vunpack.c.h.b16 %v594
        %v607 = vpack.c.b16 %v601, %v599
        %v608 = vpack.c.b16 %v602, %v600
        %v609 = vpack.c.b16 %v605, %v603
        %v610 = vpack.c.b16 %v606, %v604
        %v616 = vsel %vm468, %v436, 0
        %v619 = vsel %vm468, %v437, 0
        %v622 = vsel %vm468, %v438, 0
        %v625 = vsel %vm468, %v439, 0
        %v628 = vsel %vm468, %v440, 0
        %v631 = vsel %vm468, %v441, 0
        %v634 = vsel %vm468, %v442, 0
        %v637 = vsel %vm468, %v443, 0
        %639 = vmatpush.bf16.msra.mxu0 0
        %640 = vmatpush.bf16.msra.mxu0 0
        %641 = vmatpush.bf16.msra.mxu0 0
        %642 = vmatpush.bf16.msra.mxu0 0
        %643 = vmatpush.bf16.msra.mxu0 0
        %644 = vmatpush.bf16.msra.mxu0 0
        %645 = vmatpush.bf16.msra.mxu0 %v609
        %646 = vmatpush.bf16.msra.mxu0 %v607
        %647 = vmatmul.bf16.gmra.mxu0 %v616
        %v648 = vpop.f32.mrf.mxu0
        %v649 = vadd.f32 0.0, %v648
        %v650 = vpop.f32.mrf.mxu0
        %v651 = vadd.f32 0.0, %v650
        %652 = vmatmul.bf16.gmra.mxu0 %v619
        %v653 = vpop.f32.mrf.mxu0
        %v654 = vadd.f32 0.0, %v653
        %v655 = vpop.f32.mrf.mxu0
        %v656 = vadd.f32 0.0, %v655
        %657 = vmatmul.bf16.gmra.mxu0 %v622
        %v658 = vpop.f32.mrf.mxu0
        %v659 = vadd.f32 0.0, %v658
        %v660 = vpop.f32.mrf.mxu0
        %v661 = vadd.f32 0.0, %v660
        %662 = vmatmul.bf16.gmra.mxu0 %v625
        %v663 = vpop.f32.mrf.mxu0
        %v664 = vadd.f32 0.0, %v663
        %v665 = vpop.f32.mrf.mxu0
        %v666 = vadd.f32 0.0, %v665
        %667 = vmatmul.bf16.gmra.mxu0 %v628
        %v668 = vpop.f32.mrf.mxu0
        %v669 = vadd.f32 0.0, %v668
        %v670 = vpop.f32.mrf.mxu0
        %v671 = vadd.f32 0.0, %v670
        %672 = vmatmul.bf16.gmra.mxu0 %v631
        %v673 = vpop.f32.mrf.mxu0
        %v674 = vadd.f32 0.0, %v673
        %v675 = vpop.f32.mrf.mxu0
        %v676 = vadd.f32 0.0, %v675
        %677 = vmatmul.bf16.gmra.mxu0 %v634
        %v678 = vpop.f32.mrf.mxu0
        %v679 = vadd.f32 0.0, %v678
        %v680 = vpop.f32.mrf.mxu0
        %v681 = vadd.f32 0.0, %v680
        %682 = vmatmul.bf16.gmra.mxu0 %v637
        %v683 = vpop.f32.mrf.mxu0
        %v684 = vadd.f32 0.0, %v683
        %v685 = vpop.f32.mrf.mxu0
        %v686 = vadd.f32 0.0, %v685
        %687 = vdwg.mxu0
        %688 = vmatpush.bf16.msra.mxu0 0
        %689 = vmatpush.bf16.msra.mxu0 0
        %690 = vmatpush.bf16.msra.mxu0 0
        %691 = vmatpush.bf16.msra.mxu0 0
        %692 = vmatpush.bf16.msra.mxu0 0
        %693 = vmatpush.bf16.msra.mxu0 0
        %694 = vmatpush.bf16.msra.mxu0 %v610
        %695 = vmatpush.bf16.msra.mxu0 %v608
        %696 = vmatmul.bf16.gmra.mxu0 %v616
        %v697 = vpop.f32.mrf.mxu0
        %v698 = vadd.f32 0.0, %v697
        %v699 = vpop.f32.mrf.mxu0
        %v700 = vadd.f32 0.0, %v699
        %701 = vmatmul.bf16.gmra.mxu0 %v619
        %v702 = vpop.f32.mrf.mxu0
        %v703 = vadd.f32 0.0, %v702
        %v704 = vpop.f32.mrf.mxu0
        %v705 = vadd.f32 0.0, %v704
        %706 = vmatmul.bf16.gmra.mxu0 %v622
        %v707 = vpop.f32.mrf.mxu0
        %v708 = vadd.f32 0.0, %v707
        %v709 = vpop.f32.mrf.mxu0
        %v710 = vadd.f32 0.0, %v709
        %711 = vmatmul.bf16.gmra.mxu0 %v625
        %v712 = vpop.f32.mrf.mxu0
        %v713 = vadd.f32 0.0, %v712
        %v714 = vpop.f32.mrf.mxu0
        %v715 = vadd.f32 0.0, %v714
        %716 = vmatmul.bf16.gmra.mxu0 %v628
        %v717 = vpop.f32.mrf.mxu0
        %v718 = vadd.f32 0.0, %v717
        %v719 = vpop.f32.mrf.mxu0
        %v720 = vadd.f32 0.0, %v719
        %721 = vmatmul.bf16.gmra.mxu0 %v631
        %v722 = vpop.f32.mrf.mxu0
        %v723 = vadd.f32 0.0, %v722
        %v724 = vpop.f32.mrf.mxu0
        %v725 = vadd.f32 0.0, %v724
        %726 = vmatmul.bf16.gmra.mxu0 %v634
        %v727 = vpop.f32.mrf.mxu0
        %v728 = vadd.f32 0.0, %v727
        %v729 = vpop.f32.mrf.mxu0
        %v730 = vadd.f32 0.0, %v729
        %731 = vmatmul.bf16.gmra.mxu0 %v637
        %v732 = vpop.f32.mrf.mxu0
        %v733 = vadd.f32 0.0, %v732
        %v734 = vpop.f32.mrf.mxu0
        %v735 = vadd.f32 0.0, %v734
        %736 = vdwg.mxu0
        %v737 = vmul.f32 %v503, %v649
        %v738 = vmul.f32 %v552, %v698
        %v739 = vmul.f32 %v505, %v651
        %v740 = vmul.f32 %v554, %v700
        %v741 = vmul.f32 %v508, %v654
        %v742 = vmul.f32 %v557, %v703
        %v743 = vmul.f32 %v510, %v656
        %v744 = vmul.f32 %v559, %v705
        %v745 = vmul.f32 %v513, %v659
        %v746 = vmul.f32 %v562, %v708
        %v747 = vmul.f32 %v515, %v661
        %v748 = vmul.f32 %v564, %v710
        %v749 = vmul.f32 %v518, %v664
        %v750 = vmul.f32 %v567, %v713
        %v751 = vmul.f32 %v520, %v666
        %v752 = vmul.f32 %v569, %v715
        %v753 = vmul.f32 %v523, %v669
        %v754 = vmul.f32 %v572, %v718
        %v755 = vmul.f32 %v525, %v671
        %v756 = vmul.f32 %v574, %v720
        %v757 = vmul.f32 %v528, %v674
        %v758 = vmul.f32 %v577, %v723
        %v759 = vmul.f32 %v530, %v676
        %v760 = vmul.f32 %v579, %v725
        %v761 = vmul.f32 %v533, %v679
        %v762 = vmul.f32 %v582, %v728
        %v763 = vmul.f32 %v535, %v681
        %v764 = vmul.f32 %v584, %v730
        %v765 = vmul.f32 %v538, %v684
        %v766 = vmul.f32 %v587, %v733
        %v767 = vmul.f32 %v540, %v686
        %v768 = vmul.f32 %v589, %v735
        %v769 = vpack.c.bf16 %v739, %v737
        %v770 = vpack.c.bf16 %v740, %v738
        %v771 = vpack.c.bf16 %v743, %v741
        %v772 = vpack.c.bf16 %v744, %v742
        %v773 = vpack.c.bf16 %v747, %v745
        %v774 = vpack.c.bf16 %v748, %v746
        %v775 = vpack.c.bf16 %v751, %v749
        %v776 = vpack.c.bf16 %v752, %v750
        %v777 = vpack.c.bf16 %v755, %v753
        %v778 = vpack.c.bf16 %v756, %v754
        %v779 = vpack.c.bf16 %v759, %v757
        %v780 = vpack.c.bf16 %v760, %v758
        %v781 = vpack.c.bf16 %v763, %v761
        %v782 = vpack.c.bf16 %v764, %v762
        %v783 = vpack.c.bf16 %v767, %v765
        %v784 = vpack.c.bf16 %v768, %v766
        %v785 = vld [vmem:[%s4] sm:$0xf]
        %v786 = vld [vmem:[%s4 + $0x4] sm:$0xf]
        %v787 = vld [vmem:[%s4 + $0x8] sm:$0xf]
        %v788 = vld [vmem:[%s4 + $0xc] sm:$0xf]
        %v789 = vld [vmem:[%s4 + $0x10] sm:$0xf]
        %v790 = vld [vmem:[%s4 + $0x14] sm:$0xf]
        %v791 = vld [vmem:[%s4 + $0x18] sm:$0xf]
        %v792 = vld [vmem:[%s4 + $0x1c] sm:$0xf]
        %v793 = vld [vmem:[%s4 + $0x20] sm:$0xf]
        %v794 = vld [vmem:[%s4 + $0x24] sm:$0xf]
        %v795 = vld [vmem:[%s4 + $0x28] sm:$0xf]
        %v796 = vld [vmem:[%s4 + $0x2c] sm:$0xf]
        %v797 = vld [vmem:[%s4 + $0x30] sm:$0xf]
        %v798 = vld [vmem:[%s4 + $0x34] sm:$0xf]
        %v799 = vld [vmem:[%s4 + $0x38] sm:$0xf]
        %v800 = vld [vmem:[%s4 + $0x3c] sm:$0xf]
        %v801 = vld [vmem:[%s4 + $0x40] sm:$0xf]
        %v802 = vld [vmem:[%s4 + $0x44] sm:$0xf]
        %v803 = vld [vmem:[%s4 + $0x48] sm:$0xf]
        %v804 = vld [vmem:[%s4 + $0x4c] sm:$0xf]
        %v805 = vld [vmem:[%s4 + $0x50] sm:$0xf]
        %v806 = vld [vmem:[%s4 + $0x54] sm:$0xf]
        %v807 = vld [vmem:[%s4 + $0x58] sm:$0xf]
        %v808 = vld [vmem:[%s4 + $0x5c] sm:$0xf]
        %v809 = vld [vmem:[%s4 + $0x60] sm:$0xf]
        %v810 = vld [vmem:[%s4 + $0x64] sm:$0xf]
        %v811 = vld [vmem:[%s4 + $0x68] sm:$0xf]
        %v812 = vld [vmem:[%s4 + $0x6c] sm:$0xf]
        %v813 = vld [vmem:[%s4 + $0x70] sm:$0xf]
        %v814 = vld [vmem:[%s4 + $0x74] sm:$0xf]
        %v815 = vld [vmem:[%s4 + $0x78] sm:$0xf]
        %v816 = vld [vmem:[%s4 + $0x7c] sm:$0xf]
        %v817 = vld [vmem:[%s5] sm:$0xf]
        %v818 = vld [vmem:[%s5 + $0x4] sm:$0xf]
        %v819 = vld [vmem:[%s5 + $0x8] sm:$0xf]
        %v820 = vld [vmem:[%s5 + $0xc] sm:$0xf]
        %v825 = vunpack.c.l.b16 %v817
        %v826 = vunpack.c.l.b16 %v818
        %v827 = vunpack.c.l.b16 %v819
        %v828 = vunpack.c.l.b16 %v820
        %v829 = vpack.c.b16 %v826, %v825
        %v830 = vpack.c.b16 %v828, %v827
        %833 = vmatpush.bf16.msra.mxu0 0
        %834 = vmatpush.bf16.msra.mxu0 0
        %835 = vmatpush.bf16.msra.mxu0 0
        %836 = vmatpush.bf16.msra.mxu0 0
        %837 = vmatpush.bf16.msra.mxu0 0
        %838 = vmatpush.bf16.msra.mxu0 0
        %839 = vmatpush.bf16.msra.mxu0 %v830
        %840 = vmatpush.bf16.msra.mxu0 %v829
        %841 = vmatmul.bf16.gmra.mxu0 %v470
        %v842 = vpop.f32.mrf.mxu0
        %v843 = vadd.f32 0.0, %v842
        %v844 = vpop.f32.mrf.mxu0
        %v845 = vadd.f32 0.0, %v844
        %846 = vmatmul.bf16.gmra.mxu0 %v473
        %v847 = vpop.f32.mrf.mxu0
        %v848 = vadd.f32 0.0, %v847
        %v849 = vpop.f32.mrf.mxu0
        %v850 = vadd.f32 0.0, %v849
        %851 = vmatmul.bf16.gmra.mxu0 %v476
        %v852 = vpop.f32.mrf.mxu0
        %v853 = vadd.f32 0.0, %v852
        %v854 = vpop.f32.mrf.mxu0
        %v855 = vadd.f32 0.0, %v854
        %856 = vmatmul.bf16.gmra.mxu0 %v479
        %v857 = vpop.f32.mrf.mxu0
        %v858 = vadd.f32 0.0, %v857
        %v859 = vpop.f32.mrf.mxu0
        %v860 = vadd.f32 0.0, %v859
        %861 = vmatmul.bf16.gmra.mxu0 %v482
        %v862 = vpop.f32.mrf.mxu0
        %v863 = vadd.f32 0.0, %v862
        %v864 = vpop.f32.mrf.mxu0
        %v865 = vadd.f32 0.0, %v864
        %866 = vmatmul.bf16.gmra.mxu0 %v485
        %v867 = vpop.f32.mrf.mxu0
        %v868 = vadd.f32 0.0, %v867
        %v869 = vpop.f32.mrf.mxu0
        %v870 = vadd.f32 0.0, %v869
        %871 = vmatmul.bf16.gmra.mxu0 %v488
        %v872 = vpop.f32.mrf.mxu0
        %v873 = vadd.f32 0.0, %v872
        %v874 = vpop.f32.mrf.mxu0
        %v875 = vadd.f32 0.0, %v874
        %876 = vmatmul.bf16.gmra.mxu0 %v491
        %v877 = vpop.f32.mrf.mxu0
        %v878 = vadd.f32 0.0, %v877
        %v879 = vpop.f32.mrf.mxu0
        %v880 = vadd.f32 0.0, %v879
        %881 = vdwg.mxu0
        %v914 = vunpack.c.l.b16 %v785
        %v915 = vunpack.c.l.b16 %v786
        %v916 = vunpack.c.l.b16 %v787
        %v917 = vunpack.c.l.b16 %v788
        %v918 = vunpack.c.l.b16 %v789
        %v919 = vunpack.c.l.b16 %v790
        %v920 = vunpack.c.l.b16 %v791
        %v921 = vunpack.c.l.b16 %v792
        %v922 = vunpack.c.l.b16 %v793
        %v923 = vunpack.c.l.b16 %v794
        %v924 = vunpack.c.l.b16 %v795
        %v925 = vunpack.c.l.b16 %v796
        %v926 = vunpack.c.l.b16 %v797
        %v927 = vunpack.c.l.b16 %v798
        %v928 = vunpack.c.l.b16 %v799
        %v929 = vunpack.c.l.b16 %v800
        %v930 = vunpack.c.l.b16 %v801
        %v931 = vunpack.c.l.b16 %v802
        %v932 = vunpack.c.l.b16 %v803
        %v933 = vunpack.c.l.b16 %v804
        %v934 = vunpack.c.l.b16 %v805
        %v935 = vunpack.c.l.b16 %v806
        %v936 = vunpack.c.l.b16 %v807
        %v937 = vunpack.c.l.b16 %v808
        %v938 = vunpack.c.l.b16 %v809
        %v939 = vunpack.c.l.b16 %v810
        %v940 = vunpack.c.l.b16 %v811
        %v941 = vunpack.c.l.b16 %v812
        %v942 = vunpack.c.l.b16 %v813
        %v943 = vunpack.c.l.b16 %v814
        %v944 = vunpack.c.l.b16 %v815
        %v945 = vunpack.c.l.b16 %v816
        %v946 = vpack.c.b16 %v915, %v914
        %v947 = vpack.c.b16 %v917, %v916
        %v948 = vpack.c.b16 %v919, %v918
        %v949 = vpack.c.b16 %v921, %v920
        %v950 = vpack.c.b16 %v923, %v922
        %v951 = vpack.c.b16 %v925, %v924
        %v952 = vpack.c.b16 %v927, %v926
        %v953 = vpack.c.b16 %v929, %v928
        %v954 = vpack.c.b16 %v931, %v930
        %v955 = vpack.c.b16 %v933, %v932
        %v956 = vpack.c.b16 %v935, %v934
        %v957 = vpack.c.b16 %v937, %v936
        %v958 = vpack.c.b16 %v939, %v938
        %v959 = vpack.c.b16 %v941, %v940
        %v960 = vpack.c.b16 %v943, %v942
        %v961 = vpack.c.b16 %v945, %v944
        %978 = vmatpush.bf16.msra.mxu0 %v953
        %979 = vmatpush.bf16.msra.mxu0 %v952
        %980 = vmatpush.bf16.msra.mxu0 %v951
        %981 = vmatpush.bf16.msra.mxu0 %v950
        %982 = vmatpush.bf16.msra.mxu0 %v949
        %983 = vmatpush.bf16.msra.mxu0 %v948
        %984 = vmatpush.bf16.msra.mxu0 %v947
        %985 = vmatpush.bf16.msra.mxu0 %v946
        %986 = vmatmul.bf16.gmra.mxu0 %v769
        %v987 = vpop.f32.mrf.mxu0
        %v988 = vadd.f32 %v843, %v987
        %v989 = vpop.f32.mrf.mxu0
        %v990 = vadd.f32 %v845, %v989
        %991 = vmatmul.bf16.gmra.mxu0 %v771
        %v992 = vpop.f32.mrf.mxu0
        %v993 = vadd.f32 %v848, %v992
        %v994 = vpop.f32.mrf.mxu0
        %v995 = vadd.f32 %v850, %v994
        %996 = vmatmul.bf16.gmra.mxu0 %v773
        %v997 = vpop.f32.mrf.mxu0
        %v998 = vadd.f32 %v853, %v997
        %v999 = vpop.f32.mrf.mxu0
        %v1000 = vadd.f32 %v855, %v999
        %1001 = vmatmul.bf16.gmra.mxu0 %v775
        %v1002 = vpop.f32.mrf.mxu0
        %v1003 = vadd.f32 %v858, %v1002
        %v1004 = vpop.f32.mrf.mxu0
        %v1005 = vadd.f32 %v860, %v1004
        %1006 = vmatmul.bf16.gmra.mxu0 %v777
        %v1007 = vpop.f32.mrf.mxu0
        %v1008 = vadd.f32 %v863, %v1007
        %v1009 = vpop.f32.mrf.mxu0
        %v1010 = vadd.f32 %v865, %v1009
        %1011 = vmatmul.bf16.gmra.mxu0 %v779
        %v1012 = vpop.f32.mrf.mxu0
        %v1013 = vadd.f32 %v868, %v1012
        %v1014 = vpop.f32.mrf.mxu0
        %v1015 = vadd.f32 %v870, %v1014
        %1016 = vmatmul.bf16.gmra.mxu0 %v781
        %v1017 = vpop.f32.mrf.mxu0
        %v1018 = vadd.f32 %v873, %v1017
        %v1019 = vpop.f32.mrf.mxu0
        %v1020 = vadd.f32 %v875, %v1019
        %1021 = vmatmul.bf16.gmra.mxu0 %v783
        %v1022 = vpop.f32.mrf.mxu0
        %v1023 = vadd.f32 %v878, %v1022
        %v1024 = vpop.f32.mrf.mxu0
        %v1025 = vadd.f32 %v880, %v1024
        %1026 = vdwg.mxu0
        %1027 = vmatpush.bf16.msra.mxu0 %v961
        %1028 = vmatpush.bf16.msra.mxu0 %v960
        %1029 = vmatpush.bf16.msra.mxu0 %v959
        %1030 = vmatpush.bf16.msra.mxu0 %v958
        %1031 = vmatpush.bf16.msra.mxu0 %v957
        %1032 = vmatpush.bf16.msra.mxu0 %v956
        %1033 = vmatpush.bf16.msra.mxu0 %v955
        %1034 = vmatpush.bf16.msra.mxu0 %v954
        %1035 = vmatmul.bf16.gmra.mxu0 %v770
        %v1036 = vpop.f32.mrf.mxu0
        %v1037 = vadd.f32 %v988, %v1036
        %v1038 = vpop.f32.mrf.mxu0
        %v1039 = vadd.f32 %v990, %v1038
        %1040 = vmatmul.bf16.gmra.mxu0 %v772
        %v1041 = vpop.f32.mrf.mxu0
        %v1042 = vadd.f32 %v993, %v1041
        %v1043 = vpop.f32.mrf.mxu0
        %v1044 = vadd.f32 %v995, %v1043
        %1045 = vmatmul.bf16.gmra.mxu0 %v774
        %v1046 = vpop.f32.mrf.mxu0
        %v1047 = vadd.f32 %v998, %v1046
        %v1048 = vpop.f32.mrf.mxu0
        %v1049 = vadd.f32 %v1000, %v1048
        %1050 = vmatmul.bf16.gmra.mxu0 %v776
        %v1051 = vpop.f32.mrf.mxu0
        %v1052 = vadd.f32 %v1003, %v1051
        %v1053 = vpop.f32.mrf.mxu0
        %v1054 = vadd.f32 %v1005, %v1053
        %1055 = vmatmul.bf16.gmra.mxu0 %v778
        %v1056 = vpop.f32.mrf.mxu0
        %v1057 = vadd.f32 %v1008, %v1056
        %v1058 = vpop.f32.mrf.mxu0
        %v1059 = vadd.f32 %v1010, %v1058
        %1060 = vmatmul.bf16.gmra.mxu0 %v780
        %v1061 = vpop.f32.mrf.mxu0
        %v1062 = vadd.f32 %v1013, %v1061
        %v1063 = vpop.f32.mrf.mxu0
        %v1064 = vadd.f32 %v1015, %v1063
        %1065 = vmatmul.bf16.gmra.mxu0 %v782
        %v1066 = vpop.f32.mrf.mxu0
        %v1067 = vadd.f32 %v1018, %v1066
        %v1068 = vpop.f32.mrf.mxu0
        %v1069 = vadd.f32 %v1020, %v1068
        %1070 = vmatmul.bf16.gmra.mxu0 %v784
        %v1071 = vpop.f32.mrf.mxu0
        %v1072 = vadd.f32 %v1023, %v1071
        %v1073 = vpop.f32.mrf.mxu0
        %v1074 = vadd.f32 %v1025, %v1073
        %1075 = vdwg.mxu0
        %v1076 = vld [vmem:[%s6] sm:$0xf]
        %v1077 = vld [vmem:[%s6 + $0x4] sm:$0xf]
        %v1078 = vld [vmem:[%s6 + $0x8] sm:$0xf]
        %v1079 = vld [vmem:[%s6 + $0xc] sm:$0xf]
        %v1084 = vunpack.c.l.b16 %v1076
        %v1085 = vunpack.c.l.b16 %v1077
        %v1086 = vunpack.c.l.b16 %v1078
        %v1087 = vunpack.c.l.b16 %v1079
        %v1088 = vpack.c.b16 %v1085, %v1084
        %v1089 = vpack.c.b16 %v1087, %v1086
        %1092 = vmatpush.bf16.msra.mxu0 0
        %1093 = vmatpush.bf16.msra.mxu0 0
        %1094 = vmatpush.bf16.msra.mxu0 0
        %1095 = vmatpush.bf16.msra.mxu0 0
        %1096 = vmatpush.bf16.msra.mxu0 0
        %1097 = vmatpush.bf16.msra.mxu0 0
        %1098 = vmatpush.bf16.msra.mxu0 %v1089
        %1099 = vmatpush.bf16.msra.mxu0 %v1088
        %1100 = vmatmul.bf16.gmra.mxu0 %v616
        %v1101 = vpop.f32.mrf.mxu0
        %v1102 = vadd.f32 0.0, %v1101
        %v1103 = vpop.f32.mrf.mxu0
        %v1104 = vadd.f32 0.0, %v1103
        %1105 = vmatmul.bf16.gmra.mxu0 %v619
        %v1106 = vpop.f32.mrf.mxu0
        %v1107 = vadd.f32 0.0, %v1106
        %v1108 = vpop.f32.mrf.mxu0
        %v1109 = vadd.f32 0.0, %v1108
        %1110 = vmatmul.bf16.gmra.mxu0 %v622
        %v1111 = vpop.f32.mrf.mxu0
        %v1112 = vadd.f32 0.0, %v1111
        %v1113 = vpop.f32.mrf.mxu0
        %v1114 = vadd.f32 0.0, %v1113
        %1115 = vmatmul.bf16.gmra.mxu0 %v625
        %v1116 = vpop.f32.mrf.mxu0
        %v1117 = vadd.f32 0.0, %v1116
        %v1118 = vpop.f32.mrf.mxu0
        %v1119 = vadd.f32 0.0, %v1118
        %1120 = vmatmul.bf16.gmra.mxu0 %v628
        %v1121 = vpop.f32.mrf.mxu0
        %v1122 = vadd.f32 0.0, %v1121
        %v1123 = vpop.f32.mrf.mxu0
        %v1124 = vadd.f32 0.0, %v1123
        %1125 = vmatmul.bf16.gmra.mxu0 %v631
        %v1126 = vpop.f32.mrf.mxu0
        %v1127 = vadd.f32 0.0, %v1126
        %v1128 = vpop.f32.mrf.mxu0
        %v1129 = vadd.f32 0.0, %v1128
        %1130 = vmatmul.bf16.gmra.mxu0 %v634
        %v1131 = vpop.f32.mrf.mxu0
        %v1132 = vadd.f32 0.0, %v1131
        %v1133 = vpop.f32.mrf.mxu0
        %v1134 = vadd.f32 0.0, %v1133
        %1135 = vmatmul.bf16.gmra.mxu0 %v637
        %v1136 = vpop.f32.mrf.mxu0
        %v1137 = vadd.f32 0.0, %v1136
        %v1138 = vpop.f32.mrf.mxu0
        %v1139 = vadd.f32 0.0, %v1138
        %1140 = vdwg.mxu0
        %v1141 = vadd.f32 %v1037, %v1102
        %v1142 = vadd.f32 %v1039, %v1104
        %v1143 = vadd.f32 %v1042, %v1107
        %v1144 = vadd.f32 %v1044, %v1109
        %v1145 = vadd.f32 %v1047, %v1112
        %v1146 = vadd.f32 %v1049, %v1114
        %v1147 = vadd.f32 %v1052, %v1117
        %v1148 = vadd.f32 %v1054, %v1119
        %v1149 = vadd.f32 %v1057, %v1122
        %v1150 = vadd.f32 %v1059, %v1124
        %v1151 = vadd.f32 %v1062, %v1127
        %v1152 = vadd.f32 %v1064, %v1129
        %v1153 = vadd.f32 %v1067, %v1132
        %v1154 = vadd.f32 %v1069, %v1134
        %v1155 = vadd.f32 %v1072, %v1137
        %v1156 = vadd.f32 %v1074, %v1139
        %1157 = vxpose.xlu0.b32.start [1/16] %v1141, 128
        %1158 = vxpose.xlu0.b32.cont [2/16] %v1142, 128
        %1159 = vxpose.xlu0.b32.cont [3/16] %v1143, 128
        %1160 = vxpose.xlu0.b32.cont [4/16] %v1144, 128
        %1161 = vxpose.xlu0.b32.cont [5/16] %v1145, 128
        %1162 = vxpose.xlu0.b32.cont [6/16] %v1146, 128
        %1163 = vxpose.xlu0.b32.cont [7/16] %v1147, 128
        %1164 = vxpose.xlu0.b32.cont [8/16] %v1148, 128
        %1165 = vxpose.xlu0.b32.cont [9/16] %v1149, 128
        %1166 = vxpose.xlu0.b32.cont [10/16] %v1150, 128
        %1167 = vxpose.xlu0.b32.cont [11/16] %v1151, 128
        %1168 = vxpose.xlu0.b32.cont [12/16] %v1152, 128
        %1169 = vxpose.xlu0.b32.cont [13/16] %v1153, 128
        %1170 = vxpose.xlu0.b32.cont [14/16] %v1154, 128
        %1171 = vxpose.xlu0.b32.cont [15/16] %v1155, 128
        %1172 = vxpose.xlu0.b32.end [16/16] %v1156, 128
        %v1173 = vpop.trf.xlu0
        %v1174 = vpop.trf.xlu0
        %v1175 = vpop.trf.xlu0
        %v1176 = vpop.trf.xlu0
        %v1177 = vpop.trf.xlu0
        %v1178 = vpop.trf.xlu0
        %v1179 = vpop.trf.xlu0
        %v1180 = vpop.trf.xlu0
        %v1181 = vpop.trf.xlu0
        %v1182 = vpop.trf.xlu0
        %v1183 = vpop.trf.xlu0
        %v1184 = vpop.trf.xlu0
        %v1185 = vpop.trf.xlu0
        %v1186 = vpop.trf.xlu0
        %v1187 = vpop.trf.xlu0
        %v1188 = vpop.trf.xlu0
        %v1189 = vld [vmem:[%s7] sm:$0xff]
        %1191 = vset.pattern.permute.xlu0 0
        %1192 = vperm.xlu0 %1191, %v1189
        %v1193 = vpop.permute.xlu0 %1192
        %v1195 = vmul.f32 %v1173, %v1193
        %v1196 = vld [vmem:[%s8] sm:$0xff]
        %1198 = vset.pattern.permute.xlu0 0
        %1199 = vperm.xlu0 %1198, %v1196
        %v1200 = vpop.permute.xlu0 %1199
        %v1202 = vadd.f32 %v1195, %v1200
        %v1203 = vtanh.pop %v1202
        %1204 = vst [vmem:[%s366] sm:$0xff] %v1203
        %s1205 = sand.u32 %s230, 1
        %s1206 = scalar_lea.sflag [#allocation3], %s1205
        %s1207 = sand.u32 %s230, 1
        %s1208 = smul.addr %s1207, 8
        %s1209 = scalar_lea.vmem [#allocation2], %s1208
        // Predicated region
        $region57: #{forward.1} parent=55 // pred_check
          %p1210 = pneg %p240
        $region58: #{forward.1} parent=55 // pred_check_branch
          %1212 = sbr.rel (%p1210) target = $region60
        $region59: #{forward.1} parent=55 // pred_region
          %1214 = vsyncadd %s1206, 0
          %s1215 = smul.addr %s23, 8
          %s1216 = scalar_lea.hbm %s9, %s1215
          %s1218 = sshll.u32 %s1209, 4
          %s1219 = int_to_ptr.vmem [resolvable:$true] %s1218
          %s1220 = sshll.u32 %s1216, 4
          %s1221 = int_to_ptr.hbm [resolvable:$true] %s1220
          %1223 = dma.vmem_to_hbm [thread:$0]  %s1219, 128, %s1221, %s1206
        $region60: #{forward.1} parent=55 // pred_fallthru
          _
      $region56: #{forward.1} parent=5 // pred_fallthru
        _
      %p1224 = scmp.le.s32.totalorder 2, %s18
      // Predicated region
      $region61: #{forward.1} parent=5 // pred_check
        %p1225 = pneg %p1224
      $region62: #{forward.1} parent=5 // pred_check_branch
        %1227 = sbr.rel (%p1225) target = $region64
      $region63: #{forward.1} parent=5 // pred_region
        %s1228 = ssub.s32 %s18, 2
        // Predicated region
        $region65: #{forward.1} parent=63 // pred_check
          %p1229 = pneg %p246
        $region66: #{forward.1} parent=63 // pred_check_branch
          %1231 = sbr.rel (%p1229) target = $region68
        $region67: #{forward.1} parent=63 // pred_region
          %s1232 = sand.u32 %s231, 1
          %s1233 = scalar_lea.sflag [#allocation3], %s1232
          %s1234 = sand.u32 %s231, 1
          %s1235 = smul.addr %s1234, 8
          %s1236 = scalar_lea.vmem [#allocation2], %s1235
          %1238 = dma.done %s1233, 128
        $region68: #{forward.1} parent=63 // pred_fallthru
          _
      $region64: #{forward.1} parent=5 // pred_fallthru
        _
    $region6: #{forward.1} parent=1 // loop_footer
      %s22 = sadd.s32 1, %s18
    $region7: #{forward.1} parent=1 // loop_footer_branch
      %17 = sbr.rel target = $region3
    $region8: #{forward.1} parent=1 // loop_exit
      _
    %1239 = vsyncpa [#allocation3], 1
    %s1240 = scalar_lea.sflag [#allocation3], 1
    %1241 = vsyncpa %s1240, 1

</llo_original>
